<compile_context>
chip_gen: v7x
topology: tpu7x:2x2x1
jax: 0.10.0
libtpu: 0.0.40
codegen_flags: <defaults>
</compile_context>

<pallas_src>
import math

import jax
import jax.numpy as jnp
from jax.experimental import pallas as pl
from jax.experimental.pallas import tpu as pltpu


def _pick_seq_tile(seq_len, preferred=256):
    """Largest tile <= preferred that evenly divides seq_len (falls back to full).

    256 matches the 2x256x256 MXU on v6e/v7x; pass preferred=128 on v5e.
    """
    if seq_len <= preferred:
        return seq_len
    for t in (preferred, 128, 64, 32, 16, 8):
        if seq_len % t == 0:
            return t
    return seq_len


def _make_kv_proj_kernel(num_heads):
    """K/V projections into head-split (1, H, ts, hd) bf16 blocks."""

    def kernel(xk_ref, xv_ref, wk_ref, wv_ref, k_out_ref, v_out_ref):
        xk = xk_ref[0]  # (ts, D) bf16
        xv = xv_ref[0]  # (ts, D) bf16
        for h in range(num_heads):
            kh = jnp.dot(xk, wk_ref[h], preferred_element_type=jnp.float32)
            vh = jnp.dot(xv, wv_ref[h], preferred_element_type=jnp.float32)
            k_out_ref[0, h, :, :] = kh.astype(k_out_ref.dtype)
            v_out_ref[0, h, :, :] = vh.astype(v_out_ref.dtype)

    return kernel


def _make_flash_attn_kernel(num_heads, head_dims, model_dims, q_tile):
    """Fused Q-projection + online-softmax attention + output projection."""
    inv_scale = 1.0 / math.sqrt(model_dims)  # reference divides by sqrt(x_query.shape[-1])

    def kernel(xq_ref, k_ref, v_ref, wq_ref, wo_ref, o_ref,
               q_scr, m_scr, l_scr, acc_scr):
        ki = pl.program_id(2)

        @pl.when(ki == 0)
        def _init():
            xq = xq_ref[0]  # (tq, D) bf16
            for h in range(num_heads):
                qh = jnp.dot(xq, wq_ref[h], preferred_element_type=jnp.float32)
                q_scr[h] = (qh * inv_scale).astype(q_scr.dtype)  # pre-scale q once
            m_scr[...] = jnp.full(m_scr.shape, -jnp.inf, dtype=m_scr.dtype)
            l_scr[...] = jnp.zeros(l_scr.shape, dtype=l_scr.dtype)
            acc_scr[...] = jnp.zeros(acc_scr.shape, dtype=acc_scr.dtype)

        q = q_scr[...]  # (H, tq, hd) bf16 (already scaled)
        k = k_ref[0]    # (H, tk, hd) bf16
        v = v_ref[0]    # (H, tk, hd) bf16

        # Head-batched QK^T (contraction on last dims -> no explicit transpose).
        s = jnp.einsum("hqd,hkd->hqk", q, k,
                       preferred_element_type=jnp.float32)      # (H, tq, tk) f32

        m_prev = m_scr[...]                                      # (H, tq, 1)
        m_new = jnp.maximum(m_prev, jnp.max(s, axis=-1, keepdims=True))
        alpha = jnp.exp(m_prev - m_new)                          # (H, tq, 1)
        p = jnp.exp(s - m_new)                                   # f32 softmax numerator
        l_scr[...] = alpha * l_scr[...] + jnp.sum(p, axis=-1, keepdims=True)
        acc_scr[...] = alpha * acc_scr[...] + jnp.einsum(
            "hqk,hkd->hqd", p.astype(v.dtype), v,
            preferred_element_type=jnp.float32)
        m_scr[...] = m_new

        @pl.when(ki == pl.num_programs(2) - 1)
        def _finalize():
            inv_l = pl.reciprocal(l_scr[...], approx=True)       # (H, tq, 1)
            out = jnp.zeros((q_tile, model_dims), jnp.float32)
            for h in range(num_heads):
                head = (acc_scr[h] * inv_l[h]).astype(jnp.bfloat16)   # (tq, hd)
                # Fold output projection per head -> lane-dense (tq, D) output,
                # no concat of head outputs.
                out = out + jnp.dot(head, wo_ref[h],
                                    preferred_element_type=jnp.float32)
            o_ref[0] = out.astype(o_ref.dtype)

    return kernel


def van_attention(x_query, x_key, x_value, wq, wk, wv, wo, *, num_heads,
                  seq_tile=256):
    """Pallas VanAttention forward (mask=None, dropout identity).

    x_query/x_key/x_value: (B, S, D)
    wq/wk/wv/wo:           (D, D) laid out as (in_dim, out_dim) so y = x @ W
                           (PyTorch nn.Linear stores W as (out, in)).
    """
    B, S, D = x_query.shape
    assert D % num_heads == 0
    hd = D // num_heads
    out_dtype = x_query.dtype

    ts = _pick_seq_tile(S, seq_tile)   # projection / kv tile
    tq = ts                            # query tile
    tk = ts

    # Head-split, bf16 weights (host side, once).
    def split_in(w):                   # (D, D) -> (H, D, hd)
        return w.reshape(D, num_heads, hd).transpose(1, 0, 2).astype(jnp.bfloat16)

    wq_h = split_in(wq)
    wk_h = split_in(wk)
    wv_h = split_in(wv)
    wo_h = wo.reshape(num_heads, hd, D).astype(jnp.bfloat16)   # (H, hd, D)

    # bf16 activations for MXU inputs (halves activation DMA); f32 accumulation
    # inside the kernels.
    xq = x_query.astype(jnp.bfloat16)
    xk = x_key.astype(jnp.bfloat16)
    xv = x_value.astype(jnp.bfloat16)

    vmem_limit = 32 * 1024 * 1024   # explicit budget; safe on v5e/v6e/v7x

    # ---- kernel 1: K / V projections into head-split (B, H, S, hd) bf16 ----
    kv_proj = pl.pallas_call(
        _make_kv_proj_kernel(num_heads),
        out_shape=(jax.ShapeDtypeStruct((B, num_heads, S, hd), jnp.bfloat16),
                   jax.ShapeDtypeStruct((B, num_heads, S, hd), jnp.bfloat16)),
        grid_spec=pltpu.PrefetchScalarGridSpec(
            num_scalar_prefetch=0,
            grid=(B, S // ts),
            in_specs=[
                pl.BlockSpec((1, ts, D), lambda b, si: (b, si, 0)),
                pl.BlockSpec((1, ts, D), lambda b, si: (b, si, 0)),
                pl.BlockSpec((num_heads, D, hd), lambda b, si: (0, 0, 0)),
                pl.BlockSpec((num_heads, D, hd), lambda b, si: (0, 0, 0)),
            ],
            out_specs=[
                pl.BlockSpec((1, num_heads, ts, hd), lambda b, si: (b, 0, si, 0)),
                pl.BlockSpec((1, num_heads, ts, hd), lambda b, si: (b, 0, si, 0)),
            ],
        ),
        compiler_params=pltpu.CompilerParams(
            dimension_semantics=("parallel", "parallel"),
            vmem_limit_bytes=vmem_limit,
        ),
    )
    k_heads, v_heads = kv_proj(xk, xv, wk_h, wv_h)

    # ---- kernel 2: fused Q projection + flash attention + output projection ----
    attn = pl.pallas_call(
        _make_flash_attn_kernel(num_heads, hd, D, tq),
        out_shape=jax.ShapeDtypeStruct((B, S, D), out_dtype),
        grid_spec=pltpu.PrefetchScalarGridSpec(
            num_scalar_prefetch=0,
            grid=(B, S // tq, S // tk),
            in_specs=[
                pl.BlockSpec((1, tq, D), lambda b, qi, ki: (b, qi, 0)),
                pl.BlockSpec((1, num_heads, tk, hd), lambda b, qi, ki: (b, 0, ki, 0)),
                pl.BlockSpec((1, num_heads, tk, hd), lambda b, qi, ki: (b, 0, ki, 0)),
                pl.BlockSpec((num_heads, D, hd), lambda b, qi, ki: (0, 0, 0)),
                pl.BlockSpec((num_heads, hd, D), lambda b, qi, ki: (0, 0, 0)),
            ],
            out_specs=pl.BlockSpec((1, tq, D), lambda b, qi, ki: (b, qi, 0)),
            scratch_shapes=[
                pltpu.VMEM((num_heads, tq, hd), jnp.bfloat16),   # pre-scaled Q
                pltpu.VMEM((num_heads, tq, 1), jnp.float32),     # running max m
                pltpu.VMEM((num_heads, tq, 1), jnp.float32),     # running sum l
                pltpu.VMEM((num_heads, tq, hd), jnp.float32),    # output accumulator
            ],
        ),
        compiler_params=pltpu.CompilerParams(
            dimension_semantics=("parallel", "parallel", "arbitrary"),
            vmem_limit_bytes=vmem_limit,
        ),
    )
    return attn(xq, k_heads, v_heads, wq_h, wo_h)


def _reference(x_query, x_key, x_value, wq, wk, wv, wo, *, num_heads):
    """Pure-JAX f32 reference mirroring the PyTorch forward (mask=None, eval mode)."""
    B, S, D = x_query.shape
    hd = D // num_heads

    def split_heads(x):
        return x.reshape(B, S, num_heads, hd).transpose(0, 2, 1, 3)  # (B, H, S, hd)

    q = split_heads(x_query @ wq)
    k = split_heads(x_key @ wk)
    v = split_heads(x_value @ wv)
    scores = jnp.einsum("bhqd,bhkd->bhqk", q, k) / math.sqrt(D)
    weights = jax.nn.softmax(scores, axis=-1)
    result = jnp.einsum("bhqk,bhkd->bhqd", weights, v)
    result = result.transpose(0, 2, 1, 3).reshape(B, S, D)
    return result @ wo


if __name__ == "__main__":
    B, S, D, H = 2, 8, 32, 4

    key = jax.random.PRNGKey(0)
    kq, kk, kv, kwq, kwk, kwv, kwo = jax.random.split(key, 7)

    x_query = jax.random.normal(kq, (B, S, D), dtype=jnp.float32)
    x_key = jax.random.normal(kk, (B, S, D), dtype=jnp.float32)
    x_value = jax.random.normal(kv, (B, S, D), dtype=jnp.float32)

    # nn.Linear-style init (uniform in +-1/sqrt(fan_in)); stored pre-transposed
    # as (in_dim, out_dim).
    bound = 1.0 / math.sqrt(D)
    wq = jax.random.uniform(kwq, (D, D), jnp.float32, -bound, bound)
    wk = jax.random.uniform(kwk, (D, D), jnp.float32, -bound, bound)
    wv = jax.random.uniform(kwv, (D, D), jnp.float32, -bound, bound)
    wo = jax.random.uniform(kwo, (D, D), jnp.float32, -bound, bound)

    out = van_attention(x_query, x_key, x_value, wq, wk, wv, wo, num_heads=H)
    out = jax.block_until_ready(out)

    ref = _reference(x_query, x_key, x_value, wq, wk, wv, wo, num_heads=H)
    assert out.shape == (B, S, D)
    # bf16 MXU inputs (f32 accumulation, f32 softmax) -> relaxed tolerance vs
    # the pure-f32 reference.
    assert jnp.allclose(out, ref, atol=2e-2, rtol=2e-2), "mismatch vs reference"

    print("KERNEL_OK")
</pallas_src>

<mosaic_0001>
module attributes {stable_mosaic.version = 11 : i64} {
  func.func @kernel(%arg0: i32, %arg1: i32, %arg2: memref<1x8x32xbf16, #tpu.memory_space<vmem>>, %arg3: memref<1x8x32xbf16, #tpu.memory_space<vmem>>, %arg4: memref<4x32x8xbf16, #tpu.memory_space<vmem>>, %arg5: memref<4x32x8xbf16, #tpu.memory_space<vmem>>, %arg6: memref<1x4x8x8xbf16, #tpu.memory_space<vmem>>, %arg7: memref<1x4x8x8xbf16, #tpu.memory_space<vmem>>) attributes {dimension_semantics = [#tpu.dimension_semantics<parallel>, #tpu.dimension_semantics<parallel>], iteration_bounds = array<i64: 2, 1>, scalar_prefetch = 0 : i64, scratch_operands = 0 : i64, tpu.core_type = #tpu.core_type<tc>, window_params = [{transform_indices = @transform_0, window_bounds = array<i64: 1, 8, 32>}, {transform_indices = @transform_1, window_bounds = array<i64: 1, 8, 32>}, {pipeline_mode = #tpu.pipeline_mode<synchronous>, transform_indices = @transform_2, window_bounds = array<i64: 4, 32, 8>}, {pipeline_mode = #tpu.pipeline_mode<synchronous>, transform_indices = @transform_3, window_bounds = array<i64: 4, 32, 8>}, {transform_indices = @transform_4, window_bounds = array<i64: 1, 4, 8, 8>}, {transform_indices = @transform_5, window_bounds = array<i64: 1, 4, 8, 8>}]} {
    %c0 = arith.constant 0 : index
    %c0_0 = arith.constant 0 : index
    %c0_1 = arith.constant 0 : index
    %0 = vector.load %arg2[%c0, %c0_0, %c0_1] : memref<1x8x32xbf16, #tpu.memory_space<vmem>>, vector<1x8x32xbf16>
    %1 = vector.shape_cast %0 : vector<1x8x32xbf16> to vector<8x32xbf16>
    %c0_2 = arith.constant 0 : index
    %c0_3 = arith.constant 0 : index
    %c0_4 = arith.constant 0 : index
    %2 = vector.load %arg3[%c0_2, %c0_3, %c0_4] : memref<1x8x32xbf16, #tpu.memory_space<vmem>>, vector<1x8x32xbf16>
    %3 = vector.shape_cast %2 : vector<1x8x32xbf16> to vector<8x32xbf16>
    %c0_5 = arith.constant 0 : index
    %c0_6 = arith.constant 0 : index
    %c0_7 = arith.constant 0 : index
    %4 = vector.load %arg4[%c0_5, %c0_6, %c0_7] : memref<4x32x8xbf16, #tpu.memory_space<vmem>>, vector<1x32x8xbf16>
    %5 = vector.shape_cast %4 : vector<1x32x8xbf16> to vector<32x8xbf16>
    %cst = arith.constant dense<0.000000e+00> : vector<8x8xf32>
    %6 = tpu.matmul %1, %5, %cst {dimension_numbers = #tpu.dot_dimension_numbers<[1], [0], [0], [1], [0, 0, 1, 1], [], []>} : vector<8x32xbf16>, vector<32x8xbf16>, vector<8x8xf32> -> vector<8x8xf32>
    %c0_8 = arith.constant 0 : index
    %c0_9 = arith.constant 0 : index
    %c0_10 = arith.constant 0 : index
    %7 = vector.load %arg5[%c0_8, %c0_9, %c0_10] : memref<4x32x8xbf16, #tpu.memory_space<vmem>>, vector<1x32x8xbf16>
    %8 = vector.shape_cast %7 : vector<1x32x8xbf16> to vector<32x8xbf16>
    %cst_11 = arith.constant dense<0.000000e+00> : vector<8x8xf32>
    %9 = tpu.matmul %3, %8, %cst_11 {dimension_numbers = #tpu.dot_dimension_numbers<[1], [0], [0], [1], [0, 0, 1, 1], [], []>} : vector<8x32xbf16>, vector<32x8xbf16>, vector<8x8xf32> -> vector<8x8xf32>
    %10 = arith.truncf %6 : vector<8x8xf32> to vector<8x8xbf16>
    %c0_12 = arith.constant 0 : index
    %c0_13 = arith.constant 0 : index
    %c0_14 = arith.constant 0 : index
    %c0_15 = arith.constant 0 : index
    %11 = vector.load %arg6[%c0_12, %c0_13, %c0_14, %c0_15] : memref<1x4x8x8xbf16, #tpu.memory_space<vmem>>, vector<1x1x8x8xbf16>
    %12 = vector.shape_cast %11 : vector<1x1x8x8xbf16> to vector<8x8xbf16>
    %13 = vector.shape_cast %10 : vector<8x8xbf16> to vector<1x1x8x8xbf16>
    tpu.vector_store %arg6[%c0_12, %c0_13, %c0_14, %c0_15], %13 {strides = array<i32>} : memref<1x4x8x8xbf16, #tpu.memory_space<vmem>>, vector<1x1x8x8xbf16>,
    %14 = arith.truncf %9 : vector<8x8xf32> to vector<8x8xbf16>
    %c0_16 = arith.constant 0 : index
    %c0_17 = arith.constant 0 : index
    %c0_18 = arith.constant 0 : index
    %c0_19 = arith.constant 0 : index
    %15 = vector.load %arg7[%c0_16, %c0_17, %c0_18, %c0_19] : memref<1x4x8x8xbf16, #tpu.memory_space<vmem>>, vector<1x1x8x8xbf16>
    %16 = vector.shape_cast %15 : vector<1x1x8x8xbf16> to vector<8x8xbf16>
    %17 = vector.shape_cast %14 : vector<8x8xbf16> to vector<1x1x8x8xbf16>
    tpu.vector_store %arg7[%c0_16, %c0_17, %c0_18, %c0_19], %17 {strides = array<i32>} : memref<1x4x8x8xbf16, #tpu.memory_space<vmem>>, vector<1x1x8x8xbf16>,
    %c1 = arith.constant 1 : index
    %c0_20 = arith.constant 0 : index
    %c0_21 = arith.constant 0 : index
    %18 = vector.load %arg4[%c1, %c0_20, %c0_21] : memref<4x32x8xbf16, #tpu.memory_space<vmem>>, vector<1x32x8xbf16>
    %19 = vector.shape_cast %18 : vector<1x32x8xbf16> to vector<32x8xbf16>
    %cst_22 = arith.constant dense<0.000000e+00> : vector<8x8xf32>
    %20 = tpu.matmul %1, %19, %cst_22 {dimension_numbers = #tpu.dot_dimension_numbers<[1], [0], [0], [1], [0, 0, 1, 1], [], []>} : vector<8x32xbf16>, vector<32x8xbf16>, vector<8x8xf32> -> vector<8x8xf32>
    %c1_23 = arith.constant 1 : index
    %c0_24 = arith.constant 0 : index
    %c0_25 = arith.constant 0 : index
    %21 = vector.load %arg5[%c1_23, %c0_24, %c0_25] : memref<4x32x8xbf16, #tpu.memory_space<vmem>>, vector<1x32x8xbf16>
    %22 = vector.shape_cast %21 : vector<1x32x8xbf16> to vector<32x8xbf16>
    %cst_26 = arith.constant dense<0.000000e+00> : vector<8x8xf32>
    %23 = tpu.matmul %3, %22, %cst_26 {dimension_numbers = #tpu.dot_dimension_numbers<[1], [0], [0], [1], [0, 0, 1, 1], [], []>} : vector<8x32xbf16>, vector<32x8xbf16>, vector<8x8xf32> -> vector<8x8xf32>
    %24 = arith.truncf %20 : vector<8x8xf32> to vector<8x8xbf16>
    %c0_27 = arith.constant 0 : index
    %c1_28 = arith.constant 1 : index
    %c0_29 = arith.constant 0 : index
    %c0_30 = arith.constant 0 : index
    %25 = vector.load %arg6[%c0_27, %c1_28, %c0_29, %c0_30] : memref<1x4x8x8xbf16, #tpu.memory_space<vmem>>, vector<1x1x8x8xbf16>
    %26 = vector.shape_cast %25 : vector<1x1x8x8xbf16> to vector<8x8xbf16>
    %27 = vector.shape_cast %24 : vector<8x8xbf16> to vector<1x1x8x8xbf16>
    tpu.vector_store %arg6[%c0_27, %c1_28, %c0_29, %c0_30], %27 {strides = array<i32>} : memref<1x4x8x8xbf16, #tpu.memory_space<vmem>>, vector<1x1x8x8xbf16>,
    %28 = arith.truncf %23 : vector<8x8xf32> to vector<8x8xbf16>
    %c0_31 = arith.constant 0 : index
    %c1_32 = arith.constant 1 : index
    %c0_33 = arith.constant 0 : index
    %c0_34 = arith.constant 0 : index
    %29 = vector.load %arg7[%c0_31, %c1_32, %c0_33, %c0_34] : memref<1x4x8x8xbf16, #tpu.memory_space<vmem>>, vector<1x1x8x8xbf16>
    %30 = vector.shape_cast %29 : vector<1x1x8x8xbf16> to vector<8x8xbf16>
    %31 = vector.shape_cast %28 : vector<8x8xbf16> to vector<1x1x8x8xbf16>
    tpu.vector_store %arg7[%c0_31, %c1_32, %c0_33, %c0_34], %31 {strides = array<i32>} : memref<1x4x8x8xbf16, #tpu.memory_space<vmem>>, vector<1x1x8x8xbf16>,
    %c2 = arith.constant 2 : index
    %c0_35 = arith.constant 0 : index
    %c0_36 = arith.constant 0 : index
    %32 = vector.load %arg4[%c2, %c0_35, %c0_36] : memref<4x32x8xbf16, #tpu.memory_space<vmem>>, vector<1x32x8xbf16>
    %33 = vector.shape_cast %32 : vector<1x32x8xbf16> to vector<32x8xbf16>
    %cst_37 = arith.constant dense<0.000000e+00> : vector<8x8xf32>
    %34 = tpu.matmul %1, %33, %cst_37 {dimension_numbers = #tpu.dot_dimension_numbers<[1], [0], [0], [1], [0, 0, 1, 1], [], []>} : vector<8x32xbf16>, vector<32x8xbf16>, vector<8x8xf32> -> vector<8x8xf32>
    %c2_38 = arith.constant 2 : index
    %c0_39 = arith.constant 0 : index
    %c0_40 = arith.constant 0 : index
    %35 = vector.load %arg5[%c2_38, %c0_39, %c0_40] : memref<4x32x8xbf16, #tpu.memory_space<vmem>>, vector<1x32x8xbf16>
    %36 = vector.shape_cast %35 : vector<1x32x8xbf16> to vector<32x8xbf16>
    %cst_41 = arith.constant dense<0.000000e+00> : vector<8x8xf32>
    %37 = tpu.matmul %3, %36, %cst_41 {dimension_numbers = #tpu.dot_dimension_numbers<[1], [0], [0], [1], [0, 0, 1, 1], [], []>} : vector<8x32xbf16>, vector<32x8xbf16>, vector<8x8xf32> -> vector<8x8xf32>
    %38 = arith.truncf %34 : vector<8x8xf32> to vector<8x8xbf16>
    %c0_42 = arith.constant 0 : index
    %c2_43 = arith.constant 2 : index
    %c0_44 = arith.constant 0 : index
    %c0_45 = arith.constant 0 : index
    %39 = vector.load %arg6[%c0_42, %c2_43, %c0_44, %c0_45] : memref<1x4x8x8xbf16, #tpu.memory_space<vmem>>, vector<1x1x8x8xbf16>
    %40 = vector.shape_cast %39 : vector<1x1x8x8xbf16> to vector<8x8xbf16>
    %41 = vector.shape_cast %38 : vector<8x8xbf16> to vector<1x1x8x8xbf16>
    tpu.vector_store %arg6[%c0_42, %c2_43, %c0_44, %c0_45], %41 {strides = array<i32>} : memref<1x4x8x8xbf16, #tpu.memory_space<vmem>>, vector<1x1x8x8xbf16>,
    %42 = arith.truncf %37 : vector<8x8xf32> to vector<8x8xbf16>
    %c0_46 = arith.constant 0 : index
    %c2_47 = arith.constant 2 : index
    %c0_48 = arith.constant 0 : index
    %c0_49 = arith.constant 0 : index
    %43 = vector.load %arg7[%c0_46, %c2_47, %c0_48, %c0_49] : memref<1x4x8x8xbf16, #tpu.memory_space<vmem>>, vector<1x1x8x8xbf16>
    %44 = vector.shape_cast %43 : vector<1x1x8x8xbf16> to vector<8x8xbf16>
    %45 = vector.shape_cast %42 : vector<8x8xbf16> to vector<1x1x8x8xbf16>
    tpu.vector_store %arg7[%c0_46, %c2_47, %c0_48, %c0_49], %45 {strides = array<i32>} : memref<1x4x8x8xbf16, #tpu.memory_space<vmem>>, vector<1x1x8x8xbf16>,
    %c3 = arith.constant 3 : index
    %c0_50 = arith.constant 0 : index
    %c0_51 = arith.constant 0 : index
    %46 = vector.load %arg4[%c3, %c0_50, %c0_51] : memref<4x32x8xbf16, #tpu.memory_space<vmem>>, vector<1x32x8xbf16>
    %47 = vector.shape_cast %46 : vector<1x32x8xbf16> to vector<32x8xbf16>
    %cst_52 = arith.constant dense<0.000000e+00> : vector<8x8xf32>
    %48 = tpu.matmul %1, %47, %cst_52 {dimension_numbers = #tpu.dot_dimension_numbers<[1], [0], [0], [1], [0, 0, 1, 1], [], []>} : vector<8x32xbf16>, vector<32x8xbf16>, vector<8x8xf32> -> vector<8x8xf32>
    %c3_53 = arith.constant 3 : index
    %c0_54 = arith.constant 0 : index
    %c0_55 = arith.constant 0 : index
    %49 = vector.load %arg5[%c3_53, %c0_54, %c0_55] : memref<4x32x8xbf16, #tpu.memory_space<vmem>>, vector<1x32x8xbf16>
    %50 = vector.shape_cast %49 : vector<1x32x8xbf16> to vector<32x8xbf16>
    %cst_56 = arith.constant dense<0.000000e+00> : vector<8x8xf32>
    %51 = tpu.matmul %3, %50, %cst_56 {dimension_numbers = #tpu.dot_dimension_numbers<[1], [0], [0], [1], [0, 0, 1, 1], [], []>} : vector<8x32xbf16>, vector<32x8xbf16>, vector<8x8xf32> -> vector<8x8xf32>
    %52 = arith.truncf %48 : vector<8x8xf32> to vector<8x8xbf16>
    %c0_57 = arith.constant 0 : index
    %c3_58 = arith.constant 3 : index
    %c0_59 = arith.constant 0 : index
    %c0_60 = arith.constant 0 : index
    %53 = vector.load %arg6[%c0_57, %c3_58, %c0_59, %c0_60] : memref<1x4x8x8xbf16, #tpu.memory_space<vmem>>, vector<1x1x8x8xbf16>
    %54 = vector.shape_cast %53 : vector<1x1x8x8xbf16> to vector<8x8xbf16>
    %55 = vector.shape_cast %52 : vector<8x8xbf16> to vector<1x1x8x8xbf16>
    tpu.vector_store %arg6[%c0_57, %c3_58, %c0_59, %c0_60], %55 {strides = array<i32>} : memref<1x4x8x8xbf16, #tpu.memory_space<vmem>>, vector<1x1x8x8xbf16>,
    %56 = arith.truncf %51 : vector<8x8xf32> to vector<8x8xbf16>
    %c0_61 = arith.constant 0 : index
    %c3_62 = arith.constant 3 : index
    %c0_63 = arith.constant 0 : index
    %c0_64 = arith.constant 0 : index
    %57 = vector.load %arg7[%c0_61, %c3_62, %c0_63, %c0_64] : memref<1x4x8x8xbf16, #tpu.memory_space<vmem>>, vector<1x1x8x8xbf16>
    %58 = vector.shape_cast %57 : vector<1x1x8x8xbf16> to vector<8x8xbf16>
    %59 = vector.shape_cast %56 : vector<8x8xbf16> to vector<1x1x8x8xbf16>
    tpu.vector_store %arg7[%c0_61, %c3_62, %c0_63, %c0_64], %59 {strides = array<i32>} : memref<1x4x8x8xbf16, #tpu.memory_space<vmem>>, vector<1x1x8x8xbf16>,
    return
  }
  func.func @transform_0(%arg0: i32, %arg1: i32) -> (i32, i32, i32) {
    %c0_i32 = arith.constant 0 : i32
    %c0_i32_0 = arith.constant 0 : i32
    return %arg0, %arg1, %c0_i32 : i32, i32, i32
  }
  func.func @transform_1(%arg0: i32, %arg1: i32) -> (i32, i32, i32) {
    %c0_i32 = arith.constant 0 : i32
    %c0_i32_0 = arith.constant 0 : i32
    return %arg0, %arg1, %c0_i32 : i32, i32, i32
  }
  func.func @transform_2(%arg0: i32, %arg1: i32) -> (i32, i32, i32) {
    %c0_i32 = arith.constant 0 : i32
    %c0_i32_0 = arith.constant 0 : i32
    %c0_i32_1 = arith.constant 0 : i32
    %c0_i32_2 = arith.constant 0 : i32
    return %c0_i32, %c0_i32_0, %c0_i32_1 : i32, i32, i32
  }
  func.func @transform_3(%arg0: i32, %arg1: i32) -> (i32, i32, i32) {
    %c0_i32 = arith.constant 0 : i32
    %c0_i32_0 = arith.constant 0 : i32
    %c0_i32_1 = arith.constant 0 : i32
    %c0_i32_2 = arith.constant 0 : i32
    return %c0_i32, %c0_i32_0, %c0_i32_1 : i32, i32, i32
  }
  func.func @transform_4(%arg0: i32, %arg1: i32) -> (i32, i32, i32, i32) {
    %c0_i32 = arith.constant 0 : i32
    %c0_i32_0 = arith.constant 0 : i32
    %c0_i32_1 = arith.constant 0 : i32
    return %arg0, %c0_i32, %arg1, %c0_i32_0 : i32, i32, i32, i32
  }
  func.func @transform_5(%arg0: i32, %arg1: i32) -> (i32, i32, i32, i32) {
    %c0_i32 = arith.constant 0 : i32
    %c0_i32_0 = arith.constant 0 : i32
    %c0_i32_1 = arith.constant 0 : i32
    return %arg0, %c0_i32, %arg1, %c0_i32_0 : i32, i32, i32, i32
  }
}

</mosaic_0001>

<llo_original>
// kernel: tpu_custom_call.1
$region0: #{tpu_custom_call.1}
  #allocation0 [shape = 'u32[]', space=smem, size = 0x4, offset = 0x4, fixed_abs, tag = 'smem constant byte address 0x4 - core index']
  #allocation1 [shape = 'u32[144,128]{1,0:T(1,128)}', space=vmem, size = 0x12000, scoped, tag = 'internal scratch']
  %s0 = inlined_call_operand.vmem [shape: bf16[2,8,32], index: 0, kind: input, shape index: {}]
  %s1 = inlined_call_operand.vmem [shape: bf16[2,8,32], index: 1, kind: input, shape index: {}]
  %s2 = inlined_call_operand.vmem [shape: bf16[4,32,8], index: 2, kind: input, shape index: {}]
  %s3 = inlined_call_operand.vmem [shape: bf16[4,32,8], index: 3, kind: input, shape index: {}]
  %s4 = inlined_call_operand.hbm [shape: bf16[2,4,8,8], index: 4, kind: output, shape index: {0}]
  %s5 = inlined_call_operand.hbm [shape: bf16[2,4,8,8], index: 5, kind: output, shape index: {1}]
  %6 = xla_tuple %s4, %s5
  %s7 = sld [smem:[#allocation0]]
  $region57: #{tpu_custom_call.1} parent=0
    _
  %s9 = ssub.s32 1, %s7
  %s10 = scalar_select 0, %s9, %s7
  $region1: #{tpu_custom_call.1} parent=0
    #allocation2 [shape = 'u8[16384]{0}', space=vmem, size = 0x4000, scoped, tag = 'output window, operand 0']
    #allocation3 [shape = 's32[2]{0}', space=sflag, size = 0x8, scoped, tag = 'scoped memory for tpu_custom_call.1']
    #allocation4 [shape = 'u8[16384]{0}', space=vmem, size = 0x4000, scoped, tag = 'output window, operand 1']
    #allocation5 [shape = 's32[2]{0}', space=sflag, size = 0x8, scoped, tag = 'scoped memory for tpu_custom_call.1']
    %11 = vsyncpa [#allocation3], 0
    %s12 = scalar_lea.sflag [#allocation3], 1
    %13 = vsyncpa %s12, 0
    %14 = vsyncpa [#allocation5], 0
    %s15 = scalar_lea.sflag [#allocation5], 1
    %16 = vsyncpa %s15, 0
    loop: start=0, step=1, limit=4
    $region2: #{tpu_custom_call.1} parent=1 // loop_pre_header
      _
    $region3: #{tpu_custom_call.1} parent=1 // loop_header
      %s18 = sphi 0, %s22
      %p19 = scmp.ge.s32.totalorder %s18, 4
      %s25 = sphi 0, %s37
      %s26 = sphi 0, %s33
      %s27 = sphi 0, %s25
      %s28 = sphi 0, %s26
      %s29 = sphi 0, %s27
      %s30 = sphi 0, %s28
      %s42 = sphi 0, %s44
      %s45 = sphi 0, %s42
      %s46 = sphi 0, %s45
      %s62 = sphi 0, %s46
      %s70 = sphi 0, %s72
      %s73 = sphi 0, %s70
      %s74 = sphi 0, %s73
      %s90 = sphi 0, %s74
      %s94 = sphi 0, %s94
      %s96 = sphi 0, %s94
      %s97 = sphi 0, %s96
      %s111 = sphi 0, %s97
      %s115 = sphi 0, %s115
      %s117 = sphi 0, %s115
      %s118 = sphi 0, %s117
      %s132 = sphi 0, %s118
      %s140 = sphi 0, %s142
      %s143 = sphi 0, %s140
      %s144 = sphi 0, %s143
      %s160 = sphi 0, %s144
      %s168 = sphi 0, %s170
      %s171 = sphi 0, %s168
      %s172 = sphi 0, %s171
      %s188 = sphi 0, %s172
    $region4: #{tpu_custom_call.1} parent=1 // loop_header_branch
      %21 = sbr.rel (%p19) target = $region8
    $region5: #{tpu_custom_call.1} parent=1 // loop_body
      %s23 = ssub.s32 %s18, 1
      %s24 = ssub.s32 %s18, 2
      %s31 = sadd.s32 1, %s26
      %p32 = scmp.ge.s32.totalorder %s31, 1
      %s33 = scalar_select %p32, 0, %s31
      %s34 = sadd.s32 1, %s25
      %s35 = scalar_select %p32, %s34, %s25
      %p36 = scmp.ge.s32.totalorder %s35, 2
      %s37 = scalar_select %p36, 0, %s35
      %s38 = ssub.s32 %s25, %s37
      %s39 = ssub.s32 %s26, %s33
      %s40 = sor.u32 %s38, %s39
      %p41 = scmp.eq.s32.totalorder %s40, 0
      %s43 = sadd.s32 %s42, 1
      %s44 = scalar_select %p41, %s42, %s43
      %p47 = pneg %p41
      %p48 = scmp.eq.s32.totalorder %s18, 1
      %p49 = por %p47, %p48
      %p50 = scmp.ne.s32.totalorder %s42, %s45
      %p51 = scmp.eq.s32.totalorder %s18, 0
      %p52 = por %p50, %p51
      %p53 = scmp.ne.s32.totalorder %s42, %s45
      %p54 = scmp.eq.s32.totalorder %s23, 1
      %p55 = por %p53, %p54
      %p56 = scmp.ne.s32.totalorder %s45, %s46
      %p57 = scmp.eq.s32.totalorder %s23, 0
      %p58 = por %p56, %p57
      %p59 = scmp.ne.s32.totalorder %s45, %s46
      %p60 = scmp.eq.s32.totalorder %s24, 1
      %p61 = por %p59, %p60
      %p63 = scmp.ne.s32.totalorder %s46, %s62
      %p64 = scmp.eq.s32.totalorder %s24, 0
      %p65 = por %p63, %p64
      %s66 = ssub.s32 %s25, %s37
      %s67 = ssub.s32 %s26, %s33
      %s68 = sor.u32 %s66, %s67
      %p69 = scmp.eq.s32.totalorder %s68, 0
      %s71 = sadd.s32 %s70, 1
      %s72 = scalar_select %p69, %s70, %s71
      %p75 = pneg %p69
      %p76 = scmp.eq.s32.totalorder %s18, 1
      %p77 = por %p75, %p76
      %p78 = scmp.ne.s32.totalorder %s70, %s73
      %p79 = scmp.eq.s32.totalorder %s18, 0
      %p80 = por %p78, %p79
      %p81 = scmp.ne.s32.totalorder %s70, %s73
      %p82 = scmp.eq.s32.totalorder %s23, 1
      %p83 = por %p81, %p82
      %p84 = scmp.ne.s32.totalorder %s73, %s74
      %p85 = scmp.eq.s32.totalorder %s23, 0
      %p86 = por %p84, %p85
      %p87 = scmp.ne.s32.totalorder %s73, %s74
      %p88 = scmp.eq.s32.totalorder %s24, 1
      %p89 = por %p87, %p88
      %p91 = scmp.ne.s32.totalorder %s74, %s90
      %p92 = scmp.eq.s32.totalorder %s24, 0
      %p93 = por %p91, %p92
      %s95 = sadd.s32 %s94, 1
      %p98 = scmp.eq.s32.totalorder %s18, 1
      %p99 = scmp.ne.s32.totalorder %s94, %s96
      %p100 = scmp.eq.s32.totalorder %s18, 0
      %p101 = por %p99, %p100
      %p102 = scmp.ne.s32.totalorder %s94, %s96
      %p103 = scmp.eq.s32.totalorder %s23, 1
      %p104 = por %p102, %p103
      %p105 = scmp.ne.s32.totalorder %s96, %s97
      %p106 = scmp.eq.s32.totalorder %s23, 0
      %p107 = por %p105, %p106
      %p108 = scmp.ne.s32.totalorder %s96, %s97
      %p109 = scmp.eq.s32.totalorder %s24, 1
      %p110 = por %p108, %p109
      %p112 = scmp.ne.s32.totalorder %s97, %s111
      %p113 = scmp.eq.s32.totalorder %s24, 0
      %p114 = por %p112, %p113
      %s116 = sadd.s32 %s115, 1
      %p119 = scmp.eq.s32.totalorder %s18, 1
      %p120 = scmp.ne.s32.totalorder %s115, %s117
      %p121 = scmp.eq.s32.totalorder %s18, 0
      %p122 = por %p120, %p121
      %p123 = scmp.ne.s32.totalorder %s115, %s117
      %p124 = scmp.eq.s32.totalorder %s23, 1
      %p125 = por %p123, %p124
      %p126 = scmp.ne.s32.totalorder %s117, %s118
      %p127 = scmp.eq.s32.totalorder %s23, 0
      %p128 = por %p126, %p127
      %p129 = scmp.ne.s32.totalorder %s117, %s118
      %p130 = scmp.eq.s32.totalorder %s24, 1
      %p131 = por %p129, %p130
      %p133 = scmp.ne.s32.totalorder %s118, %s132
      %p134 = scmp.eq.s32.totalorder %s24, 0
      %p135 = por %p133, %p134
      %s136 = ssub.s32 %s25, %s37
      %s137 = ssub.s32 %s26, %s33
      %s138 = sor.u32 %s136, %s137
      %p139 = scmp.eq.s32.totalorder %s138, 0
      %s141 = sadd.s32 %s140, 1
      %s142 = scalar_select %p139, %s140, %s141
      %p145 = pneg %p139
      %p146 = scmp.eq.s32.totalorder %s18, 1
      %p147 = por %p145, %p146
      %p148 = scmp.ne.s32.totalorder %s140, %s143
      %p149 = scmp.eq.s32.totalorder %s18, 0
      %p150 = por %p148, %p149
      %p151 = scmp.ne.s32.totalorder %s140, %s143
      %p152 = scmp.eq.s32.totalorder %s23, 1
      %p153 = por %p151, %p152
      %p154 = scmp.ne.s32.totalorder %s143, %s144
      %p155 = scmp.eq.s32.totalorder %s23, 0
      %p156 = por %p154, %p155
      %p157 = scmp.ne.s32.totalorder %s143, %s144
      %p158 = scmp.eq.s32.totalorder %s24, 1
      %p159 = por %p157, %p158
      %p161 = scmp.ne.s32.totalorder %s144, %s160
      %p162 = scmp.eq.s32.totalorder %s24, 0
      %p163 = por %p161, %p162
      %s164 = ssub.s32 %s25, %s37
      %s165 = ssub.s32 %s26, %s33
      %s166 = sor.u32 %s164, %s165
      %p167 = scmp.eq.s32.totalorder %s166, 0
      %s169 = sadd.s32 %s168, 1
      %s170 = scalar_select %p167, %s168, %s169
      %p173 = pneg %p167
      %p174 = scmp.eq.s32.totalorder %s18, 1
      %p175 = por %p173, %p174
      %p176 = scmp.ne.s32.totalorder %s168, %s171
      %p177 = scmp.eq.s32.totalorder %s18, 0
      %p178 = por %p176, %p177
      %p179 = scmp.ne.s32.totalorder %s168, %s171
      %p180 = scmp.eq.s32.totalorder %s23, 1
      %p181 = por %p179, %p180
      %p182 = scmp.ne.s32.totalorder %s171, %s172
      %p183 = scmp.eq.s32.totalorder %s23, 0
      %p184 = por %p182, %p183
      %p185 = scmp.ne.s32.totalorder %s171, %s172
      %p186 = scmp.eq.s32.totalorder %s24, 1
      %p187 = por %p185, %p186
      %p189 = scmp.ne.s32.totalorder %s172, %s188
      %p190 = scmp.eq.s32.totalorder %s24, 0
      %p191 = por %p189, %p190
      %p192 = scmp.le.s32.totalorder 1, %s18
      %p193 = scmp.lt.s32.totalorder %s18, 3
      %p194 = pnand %p192, %p193
      %p195 = pneg %p194
      // Predicated region
      $region9: #{tpu_custom_call.1} parent=5 // pred_check
        _
      $region10: #{tpu_custom_call.1} parent=5 // pred_check_branch
        %197 = sbr.rel (%p194) target = $region12
      $region11: #{tpu_custom_call.1} parent=5 // pred_region
        %s198 = ssub.s32 %s18, 1
        // Predicated region
        $region13: #{tpu_custom_call.1} parent=11 // pred_check
          %p199 = pneg %p107
        $region14: #{tpu_custom_call.1} parent=11 // pred_check_branch
          %201 = sbr.rel (%p199) target = $region16
        $region15: #{tpu_custom_call.1} parent=11 // pred_region
          _
        $region16: #{tpu_custom_call.1} parent=11 // pred_fallthru
          _
        // Predicated region
        $region17: #{tpu_custom_call.1} parent=11 // pred_check
          %p202 = pneg %p128
        $region18: #{tpu_custom_call.1} parent=11 // pred_check_branch
          %204 = sbr.rel (%p202) target = $region20
        $region19: #{tpu_custom_call.1} parent=11 // pred_region
          _
        $region20: #{tpu_custom_call.1} parent=11 // pred_fallthru
          _
      $region12: #{tpu_custom_call.1} parent=5 // pred_fallthru
        _
      %p205 = scmp.lt.s32.totalorder %s18, 2
      // Predicated region
      $region21: #{tpu_custom_call.1} parent=5 // pred_check
        %p206 = pneg %p205
      $region22: #{tpu_custom_call.1} parent=5 // pred_check_branch
        %208 = sbr.rel (%p206) target = $region24
      $region23: #{tpu_custom_call.1} parent=5 // pred_region
        // Predicated region
        $region25: #{tpu_custom_call.1} parent=23 // pred_check
          %p209 = pneg %p52
        $region26: #{tpu_custom_call.1} parent=23 // pred_check_branch
          %211 = sbr.rel (%p209) target = $region28
        $region27: #{tpu_custom_call.1} parent=23 // pred_region
          %p212 = scmp.lt.s32.totalorder %s25, 1
          %s213 = scalar_select %p212, %s25, 1
          %p214 = scmp.lt.s32.totalorder %s26, 0
          %s215 = scalar_select %p214, %s26, 0
          %s216 = sadd.s32 %s215, %s213
          %s217 = smul.addr %s216, 4
          %s218 = scalar_lea.vmem %s0, %s217
        $region28: #{tpu_custom_call.1} parent=23 // pred_fallthru
          _
        // Predicated region
        $region29: #{tpu_custom_call.1} parent=23 // pred_check
          %p219 = pneg %p80
        $region30: #{tpu_custom_call.1} parent=23 // pred_check_branch
          %221 = sbr.rel (%p219) target = $region32
        $region31: #{tpu_custom_call.1} parent=23 // pred_region
          %p222 = scmp.lt.s32.totalorder %s25, 1
          %s223 = scalar_select %p222, %s25, 1
          %p224 = scmp.lt.s32.totalorder %s26, 0
          %s225 = scalar_select %p224, %s26, 0
          %s226 = sadd.s32 %s225, %s223
          %s227 = smul.addr %s226, 4
          %s228 = scalar_lea.vmem %s1, %s227
        $region32: #{tpu_custom_call.1} parent=23 // pred_fallthru
          _
      $region24: #{tpu_custom_call.1} parent=5 // pred_fallthru
        _
      %p229 = scmp.le.s32.totalorder 1, %s18
      %p230 = scmp.lt.s32.totalorder %s18, 3
      %p231 = pnand %p229, %p230
      %p232 = pneg %p231
      // Predicated region
      $region33: #{tpu_custom_call.1} parent=5 // pred_check
        _
      $region34: #{tpu_custom_call.1} parent=5 // pred_check_branch
        %234 = sbr.rel (%p231) target = $region36
      $region35: #{tpu_custom_call.1} parent=5 // pred_region
        %s235 = ssub.s32 %s18, 1
        %p236 = scmp.lt.s32.totalorder %s27, 1
        %s237 = scalar_select %p236, %s27, 1
        %p238 = scmp.lt.s32.totalorder %s28, 0
        %s239 = scalar_select %p238, %s28, 0
        %s240 = sadd.s32 %s239, %s237
        %s241 = smul.addr %s240, 4
        %s242 = scalar_lea.vmem %s0, %s241
        %p243 = pneg %p58
        %p244 = pneg %p55
        %p245 = scmp.lt.s32.totalorder %s27, 1
        %s246 = scalar_select %p245, %s27, 1
        %p247 = scmp.lt.s32.totalorder %s28, 0
        %s248 = scalar_select %p247, %s28, 0
        %s249 = sadd.s32 %s248, %s246
        %s250 = smul.addr %s249, 4
        %s251 = scalar_lea.vmem %s1, %s250
        %p252 = pneg %p86
        %p253 = pneg %p83
        %p254 = pneg %p107
        %p255 = pneg %p104
        %p256 = pneg %p128
        %p257 = pneg %p125
        %p258 = pneg %p156
        %p259 = pneg %p153
        %s260 = sand.u32 %s143, 1
        %s261 = scalar_lea.sflag [#allocation3], %s260
        %s262 = sand.u32 %s143, 1
        %s263 = smul.addr %s262, 16
        %s264 = scalar_lea.vmem [#allocation2], %s263
        %p265 = pneg %p184
        %p266 = pneg %p181
        %s267 = sand.u32 %s171, 1
        %s268 = scalar_lea.sflag [#allocation5], %s267
        %s269 = sand.u32 %s171, 1
        %s270 = smul.addr %s269, 16
        %s271 = scalar_lea.vmem [#allocation4], %s270
        %p272 = scmp.lt.s32.totalorder %s27, 1
        %s273 = scalar_select %p272, %s27, 1
        %p274 = scmp.lt.s32.totalorder %s28, 0
        %s275 = scalar_select %p274, %s28, 0
        %s276 = sadd.s32 %s275, %s273
        %s277 = smul.addr %s276, 4
        %s278 = scalar_lea.vmem %s0, %s277
        %p279 = scmp.lt.s32.totalorder %s27, 1
        %s280 = scalar_select %p279, %s27, 1
        %p281 = scmp.lt.s32.totalorder %s28, 0
        %s282 = scalar_select %p281, %s28, 0
        %s283 = sadd.s32 %s282, %s280
        %s284 = smul.addr %s283, 4
        %s285 = scalar_lea.vmem %s1, %s284
        %v287 = vld [vmem:[%s278] sm:$0xf]
        %v288 = vld [vmem:[%s285] sm:$0xf]
        %v289 = vld [vmem:[%s2] sm:$0xf]
        %v290 = vld [vmem:[%s2 + $0x4] sm:$0xf]
        %v291 = vld [vmem:[%s2 + $0x8] sm:$0xf]
        %v292 = vld [vmem:[%s2 + $0xc] sm:$0xf]
        %v297 = vunpack.c.l.b16 %v289
        %v298 = vunpack.c.l.b16 %v290
        %v299 = vunpack.c.l.b16 %v291
        %v300 = vunpack.c.l.b16 %v292
        %v301 = vpack.c.b16 %v298, %v297
        %v302 = vpack.c.b16 %v300, %v299
        %vm305 = vcmask 261120
        %v307 = vsel %vm305, %v287, 0
        %309 = vmatprep.subr.bf16.mxu0 0
        %310 = vmatpush1.bf16.msra.mxu0 %v301
        %311 = vmatprep.subr.bf16.mxu0 0
        %312 = vmatpush1.bf16.msra.mxu0 %v302
        %313 = vmatprep.subr.bf16.mxu0 0
        %314 = vmatpush1.bf16.msra.mxu0 0
        %315 = vmatprep.subr.bf16.mxu0 0
        %316 = vmatpush1.bf16.msra.mxu0 0
        %317 = vmatprep.subr.bf16.mxu0 0
        %318 = vmatpush1.bf16.msra.mxu0 0
        %319 = vmatprep.subr.bf16.mxu0 0
        %320 = vmatpush1.bf16.msra.mxu0 0
        %321 = vmatprep.subr.bf16.mxu0 0
        %322 = vmatpush1.bf16.msra.mxu0 0
        %323 = vmatprep.subr.bf16.mxu0 0
        %324 = vmatpush1.bf16.msra.mxu0 0
        %325 = vmatprep.subr.bf16.mxu0 0
        %326 = vmatpush1.bf16.msra.mxu0 0
        %327 = vmatprep.subr.bf16.mxu0 0
        %328 = vmatpush1.bf16.msra.mxu0 0
        %329 = vmatprep.subr.bf16.mxu0 0
        %330 = vmatpush1.bf16.msra.mxu0 0
        %331 = vmatprep.subr.bf16.mxu0 0
        %332 = vmatpush1.bf16.msra.mxu0 0
        %333 = vmatprep.subr.bf16.mxu0 0
        %334 = vmatpush1.bf16.msra.mxu0 0
        %335 = vmatprep.subr.bf16.mxu0 0
        %336 = vmatpush1.bf16.msra.mxu0 0
        %337 = vmatprep.subr.bf16.mxu0 0
        %338 = vmatpush1.bf16.msra.mxu0 0
        %339 = vmatprep.subr.bf16.mxu0 0
        %340 = vmatpush1.bf16.msra.mxu0 0
        %341 = vmatprep.mubr.bf16.mxu0 0
        %342 = vmatmul.mubr.bf16.gmra.mrb[0].mxu0 %v307
        %v343 = vpop.f32.mrb[0].mxu0
        %v344 = vadd.f32 0.0, %v343
        %v345 = vpop.f32.mrb[0].mxu0
        %v346 = vpop.f32.mrb[0].mxu0
        %v347 = vpop.f32.mrb[0].mxu0
        %348 = vdwg.mxu0
        %v349 = vld [vmem:[%s3] sm:$0xf]
        %v350 = vld [vmem:[%s3 + $0x4] sm:$0xf]
        %v351 = vld [vmem:[%s3 + $0x8] sm:$0xf]
        %v352 = vld [vmem:[%s3 + $0xc] sm:$0xf]
        %v357 = vunpack.c.l.b16 %v349
        %v358 = vunpack.c.l.b16 %v350
        %v359 = vunpack.c.l.b16 %v351
        %v360 = vunpack.c.l.b16 %v352
        %v361 = vpack.c.b16 %v358, %v357
        %v362 = vpack.c.b16 %v360, %v359
        %v366 = vsel %vm305, %v288, 0
        %368 = vmatprep.subr.bf16.mxu0 0
        %369 = vmatpush1.bf16.msra.mxu0 %v361
        %370 = vmatprep.subr.bf16.mxu0 0
        %371 = vmatpush1.bf16.msra.mxu0 %v362
        %372 = vmatprep.subr.bf16.mxu0 0
        %373 = vmatpush1.bf16.msra.mxu0 0
        %374 = vmatprep.subr.bf16.mxu0 0
        %375 = vmatpush1.bf16.msra.mxu0 0
        %376 = vmatprep.subr.bf16.mxu0 0
        %377 = vmatpush1.bf16.msra.mxu0 0
        %378 = vmatprep.subr.bf16.mxu0 0
        %379 = vmatpush1.bf16.msra.mxu0 0
        %380 = vmatprep.subr.bf16.mxu0 0
        %381 = vmatpush1.bf16.msra.mxu0 0
        %382 = vmatprep.subr.bf16.mxu0 0
        %383 = vmatpush1.bf16.msra.mxu0 0
        %384 = vmatprep.subr.bf16.mxu0 0
        %385 = vmatpush1.bf16.msra.mxu0 0
        %386 = vmatprep.subr.bf16.mxu0 0
        %387 = vmatpush1.bf16.msra.mxu0 0
        %388 = vmatprep.subr.bf16.mxu0 0
        %389 = vmatpush1.bf16.msra.mxu0 0
        %390 = vmatprep.subr.bf16.mxu0 0
        %391 = vmatpush1.bf16.msra.mxu0 0
        %392 = vmatprep.subr.bf16.mxu0 0
        %393 = vmatpush1.bf16.msra.mxu0 0
        %394 = vmatprep.subr.bf16.mxu0 0
        %395 = vmatpush1.bf16.msra.mxu0 0
        %396 = vmatprep.subr.bf16.mxu0 0
        %397 = vmatpush1.bf16.msra.mxu0 0
        %398 = vmatprep.subr.bf16.mxu0 0
        %399 = vmatpush1.bf16.msra.mxu0 0
        %400 = vmatprep.mubr.bf16.mxu0 0
        %401 = vmatmul.mubr.bf16.gmra.mrb[0].mxu0 %v366
        %v402 = vpop.f32.mrb[0].mxu0
        %v403 = vadd.f32 0.0, %v402
        %v404 = vpop.f32.mrb[0].mxu0
        %v405 = vpop.f32.mrb[0].mxu0
        %v406 = vpop.f32.mrb[0].mxu0
        %407 = vdwg.mxu0
        %v408 = vpack.c.bf16 %v344, %v344
        %vm409 = vcmask 60416
        %410 = vst.msk [vmem:[%s264] sm:$0xf] %vm409, %v408
        %v411 = vpack.c.bf16 %v403, %v403
        %412 = vst.msk [vmem:[%s271] sm:$0xf] %vm409, %v411
        %s413 = scalar_lea.vmem %s2, 16
        %v414 = vld [vmem:[%s413] sm:$0xf]
        %v415 = vld [vmem:[%s413 + $0x4] sm:$0xf]
        %v416 = vld [vmem:[%s413 + $0x8] sm:$0xf]
        %v417 = vld [vmem:[%s413 + $0xc] sm:$0xf]
        %v422 = vunpack.c.l.b16 %v414
        %v423 = vunpack.c.l.b16 %v415
        %v424 = vunpack.c.l.b16 %v416
        %v425 = vunpack.c.l.b16 %v417
        %v426 = vpack.c.b16 %v423, %v422
        %v427 = vpack.c.b16 %v425, %v424
        %430 = vmatprep.subr.bf16.mxu0 0
        %431 = vmatpush1.bf16.msra.mxu0 %v426
        %432 = vmatprep.subr.bf16.mxu0 0
        %433 = vmatpush1.bf16.msra.mxu0 %v427
        %434 = vmatprep.subr.bf16.mxu0 0
        %435 = vmatpush1.bf16.msra.mxu0 0
        %436 = vmatprep.subr.bf16.mxu0 0
        %437 = vmatpush1.bf16.msra.mxu0 0
        %438 = vmatprep.subr.bf16.mxu0 0
        %439 = vmatpush1.bf16.msra.mxu0 0
        %440 = vmatprep.subr.bf16.mxu0 0
        %441 = vmatpush1.bf16.msra.mxu0 0
        %442 = vmatprep.subr.bf16.mxu0 0
        %443 = vmatpush1.bf16.msra.mxu0 0
        %444 = vmatprep.subr.bf16.mxu0 0
        %445 = vmatpush1.bf16.msra.mxu0 0
        %446 = vmatprep.subr.bf16.mxu0 0
        %447 = vmatpush1.bf16.msra.mxu0 0
        %448 = vmatprep.subr.bf16.mxu0 0
        %449 = vmatpush1.bf16.msra.mxu0 0
        %450 = vmatprep.subr.bf16.mxu0 0
        %451 = vmatpush1.bf16.msra.mxu0 0
        %452 = vmatprep.subr.bf16.mxu0 0
        %453 = vmatpush1.bf16.msra.mxu0 0
        %454 = vmatprep.subr.bf16.mxu0 0
        %455 = vmatpush1.bf16.msra.mxu0 0
        %456 = vmatprep.subr.bf16.mxu0 0
        %457 = vmatpush1.bf16.msra.mxu0 0
        %458 = vmatprep.subr.bf16.mxu0 0
        %459 = vmatpush1.bf16.msra.mxu0 0
        %460 = vmatprep.subr.bf16.mxu0 0
        %461 = vmatpush1.bf16.msra.mxu0 0
        %462 = vmatprep.mubr.bf16.mxu0 0
        %463 = vmatmul.mubr.bf16.gmra.mrb[0].mxu0 %v307
        %v464 = vpop.f32.mrb[0].mxu0
        %v465 = vadd.f32 0.0, %v464
        %v466 = vpop.f32.mrb[0].mxu0
        %v467 = vpop.f32.mrb[0].mxu0
        %v468 = vpop.f32.mrb[0].mxu0
        %469 = vdwg.mxu0
        %s470 = scalar_lea.vmem %s3, 16
        %v471 = vld [vmem:[%s470] sm:$0xf]
        %v472 = vld [vmem:[%s470 + $0x4] sm:$0xf]
        %v473 = vld [vmem:[%s470 + $0x8] sm:$0xf]
        %v474 = vld [vmem:[%s470 + $0xc] sm:$0xf]
        %v479 = vunpack.c.l.b16 %v471
        %v480 = vunpack.c.l.b16 %v472
        %v481 = vunpack.c.l.b16 %v473
        %v482 = vunpack.c.l.b16 %v474
        %v483 = vpack.c.b16 %v480, %v479
        %v484 = vpack.c.b16 %v482, %v481
        %487 = vmatprep.subr.bf16.mxu0 0
        %488 = vmatpush1.bf16.msra.mxu0 %v483
        %489 = vmatprep.subr.bf16.mxu0 0
        %490 = vmatpush1.bf16.msra.mxu0 %v484
        %491 = vmatprep.subr.bf16.mxu0 0
        %492 = vmatpush1.bf16.msra.mxu0 0
        %493 = vmatprep.subr.bf16.mxu0 0
        %494 = vmatpush1.bf16.msra.mxu0 0
        %495 = vmatprep.subr.bf16.mxu0 0
        %496 = vmatpush1.bf16.msra.mxu0 0
        %497 = vmatprep.subr.bf16.mxu0 0
        %498 = vmatpush1.bf16.msra.mxu0 0
        %499 = vmatprep.subr.bf16.mxu0 0
        %500 = vmatpush1.bf16.msra.mxu0 0
        %501 = vmatprep.subr.bf16.mxu0 0
        %502 = vmatpush1.bf16.msra.mxu0 0
        %503 = vmatprep.subr.bf16.mxu0 0
        %504 = vmatpush1.bf16.msra.mxu0 0
        %505 = vmatprep.subr.bf16.mxu0 0
        %506 = vmatpush1.bf16.msra.mxu0 0
        %507 = vmatprep.subr.bf16.mxu0 0
        %508 = vmatpush1.bf16.msra.mxu0 0
        %509 = vmatprep.subr.bf16.mxu0 0
        %510 = vmatpush1.bf16.msra.mxu0 0
        %511 = vmatprep.subr.bf16.mxu0 0
        %512 = vmatpush1.bf16.msra.mxu0 0
        %513 = vmatprep.subr.bf16.mxu0 0
        %514 = vmatpush1.bf16.msra.mxu0 0
        %515 = vmatprep.subr.bf16.mxu0 0
        %516 = vmatpush1.bf16.msra.mxu0 0
        %517 = vmatprep.subr.bf16.mxu0 0
        %518 = vmatpush1.bf16.msra.mxu0 0
        %519 = vmatprep.mubr.bf16.mxu0 0
        %520 = vmatmul.mubr.bf16.gmra.mrb[0].mxu0 %v366
        %v521 = vpop.f32.mrb[0].mxu0
        %v522 = vadd.f32 0.0, %v521
        %v523 = vpop.f32.mrb[0].mxu0
        %v524 = vpop.f32.mrb[0].mxu0
        %v525 = vpop.f32.mrb[0].mxu0
        %526 = vdwg.mxu0
        %v527 = vpack.c.bf16 %v465, %v465
        %s528 = scalar_lea.vmem %s264, 4 [#allocation2]
        %529 = vst.msk [vmem:[%s528] sm:$0xf] %vm409, %v527
        %v530 = vpack.c.bf16 %v522, %v522
        %s531 = scalar_lea.vmem %s271, 4 [#allocation4]
        %532 = vst.msk [vmem:[%s531] sm:$0xf] %vm409, %v530
        %s533 = scalar_lea.vmem %s2, 32
        %v534 = vld [vmem:[%s533] sm:$0xf]
        %v535 = vld [vmem:[%s533 + $0x4] sm:$0xf]
        %v536 = vld [vmem:[%s533 + $0x8] sm:$0xf]
        %v537 = vld [vmem:[%s533 + $0xc] sm:$0xf]
        %v542 = vunpack.c.l.b16 %v534
        %v543 = vunpack.c.l.b16 %v535
        %v544 = vunpack.c.l.b16 %v536
        %v545 = vunpack.c.l.b16 %v537
        %v546 = vpack.c.b16 %v543, %v542
        %v547 = vpack.c.b16 %v545, %v544
        %550 = vmatprep.subr.bf16.mxu0 0
        %551 = vmatpush1.bf16.msra.mxu0 %v546
        %552 = vmatprep.subr.bf16.mxu0 0
        %553 = vmatpush1.bf16.msra.mxu0 %v547
        %554 = vmatprep.subr.bf16.mxu0 0
        %555 = vmatpush1.bf16.msra.mxu0 0
        %556 = vmatprep.subr.bf16.mxu0 0
        %557 = vmatpush1.bf16.msra.mxu0 0
        %558 = vmatprep.subr.bf16.mxu0 0
        %559 = vmatpush1.bf16.msra.mxu0 0
        %560 = vmatprep.subr.bf16.mxu0 0
        %561 = vmatpush1.bf16.msra.mxu0 0
        %562 = vmatprep.subr.bf16.mxu0 0
        %563 = vmatpush1.bf16.msra.mxu0 0
        %564 = vmatprep.subr.bf16.mxu0 0
        %565 = vmatpush1.bf16.msra.mxu0 0
        %566 = vmatprep.subr.bf16.mxu0 0
        %567 = vmatpush1.bf16.msra.mxu0 0
        %568 = vmatprep.subr.bf16.mxu0 0
        %569 = vmatpush1.bf16.msra.mxu0 0
        %570 = vmatprep.subr.bf16.mxu0 0
        %571 = vmatpush1.bf16.msra.mxu0 0
        %572 = vmatprep.subr.bf16.mxu0 0
        %573 = vmatpush1.bf16.msra.mxu0 0
        %574 = vmatprep.subr.bf16.mxu0 0
        %575 = vmatpush1.bf16.msra.mxu0 0
        %576 = vmatprep.subr.bf16.mxu0 0
        %577 = vmatpush1.bf16.msra.mxu0 0
        %578 = vmatprep.subr.bf16.mxu0 0
        %579 = vmatpush1.bf16.msra.mxu0 0
        %580 = vmatprep.subr.bf16.mxu0 0
        %581 = vmatpush1.bf16.msra.mxu0 0
        %582 = vmatprep.mubr.bf16.mxu0 0
        %583 = vmatmul.mubr.bf16.gmra.mrb[0].mxu0 %v307
        %v584 = vpop.f32.mrb[0].mxu0
        %v585 = vadd.f32 0.0, %v584
        %v586 = vpop.f32.mrb[0].mxu0
        %v587 = vpop.f32.mrb[0].mxu0
        %v588 = vpop.f32.mrb[0].mxu0
        %589 = vdwg.mxu0
        %s590 = scalar_lea.vmem %s3, 32
        %v591 = vld [vmem:[%s590] sm:$0xf]
        %v592 = vld [vmem:[%s590 + $0x4] sm:$0xf]
        %v593 = vld [vmem:[%s590 + $0x8] sm:$0xf]
        %v594 = vld [vmem:[%s590 + $0xc] sm:$0xf]
        %v599 = vunpack.c.l.b16 %v591
        %v600 = vunpack.c.l.b16 %v592
        %v601 = vunpack.c.l.b16 %v593
        %v602 = vunpack.c.l.b16 %v594
        %v603 = vpack.c.b16 %v600, %v599
        %v604 = vpack.c.b16 %v602, %v601
        %607 = vmatprep.subr.bf16.mxu0 0
        %608 = vmatpush1.bf16.msra.mxu0 %v603
        %609 = vmatprep.subr.bf16.mxu0 0
        %610 = vmatpush1.bf16.msra.mxu0 %v604
        %611 = vmatprep.subr.bf16.mxu0 0
        %612 = vmatpush1.bf16.msra.mxu0 0
        %613 = vmatprep.subr.bf16.mxu0 0
        %614 = vmatpush1.bf16.msra.mxu0 0
        %615 = vmatprep.subr.bf16.mxu0 0
        %616 = vmatpush1.bf16.msra.mxu0 0
        %617 = vmatprep.subr.bf16.mxu0 0
        %618 = vmatpush1.bf16.msra.mxu0 0
        %619 = vmatprep.subr.bf16.mxu0 0
        %620 = vmatpush1.bf16.msra.mxu0 0
        %621 = vmatprep.subr.bf16.mxu0 0
        %622 = vmatpush1.bf16.msra.mxu0 0
        %623 = vmatprep.subr.bf16.mxu0 0
        %624 = vmatpush1.bf16.msra.mxu0 0
        %625 = vmatprep.subr.bf16.mxu0 0
        %626 = vmatpush1.bf16.msra.mxu0 0
        %627 = vmatprep.subr.bf16.mxu0 0
        %628 = vmatpush1.bf16.msra.mxu0 0
        %629 = vmatprep.subr.bf16.mxu0 0
        %630 = vmatpush1.bf16.msra.mxu0 0
        %631 = vmatprep.subr.bf16.mxu0 0
        %632 = vmatpush1.bf16.msra.mxu0 0
        %633 = vmatprep.subr.bf16.mxu0 0
        %634 = vmatpush1.bf16.msra.mxu0 0
        %635 = vmatprep.subr.bf16.mxu0 0
        %636 = vmatpush1.bf16.msra.mxu0 0
        %637 = vmatprep.subr.bf16.mxu0 0
        %638 = vmatpush1.bf16.msra.mxu0 0
        %639 = vmatprep.mubr.bf16.mxu0 0
        %640 = vmatmul.mubr.bf16.gmra.mrb[0].mxu0 %v366
        %v641 = vpop.f32.mrb[0].mxu0
        %v642 = vadd.f32 0.0, %v641
        %v643 = vpop.f32.mrb[0].mxu0
        %v644 = vpop.f32.mrb[0].mxu0
        %v645 = vpop.f32.mrb[0].mxu0
        %646 = vdwg.mxu0
        %v647 = vpack.c.bf16 %v585, %v585
        %s648 = scalar_lea.vmem %s264, 8 [#allocation2]
        %649 = vst.msk [vmem:[%s648] sm:$0xf] %vm409, %v647
        %v650 = vpack.c.bf16 %v642, %v642
        %s651 = scalar_lea.vmem %s271, 8 [#allocation4]
        %652 = vst.msk [vmem:[%s651] sm:$0xf] %vm409, %v650
        %s653 = scalar_lea.vmem %s2, 48
        %v654 = vld [vmem:[%s653] sm:$0xf]
        %v655 = vld [vmem:[%s653 + $0x4] sm:$0xf]
        %v656 = vld [vmem:[%s653 + $0x8] sm:$0xf]
        %v657 = vld [vmem:[%s653 + $0xc] sm:$0xf]
        %v662 = vunpack.c.l.b16 %v654
        %v663 = vunpack.c.l.b16 %v655
        %v664 = vunpack.c.l.b16 %v656
        %v665 = vunpack.c.l.b16 %v657
        %v666 = vpack.c.b16 %v663, %v662
        %v667 = vpack.c.b16 %v665, %v664
        %670 = vmatprep.subr.bf16.mxu0 0
        %671 = vmatpush1.bf16.msra.mxu0 %v666
        %672 = vmatprep.subr.bf16.mxu0 0
        %673 = vmatpush1.bf16.msra.mxu0 %v667
        %674 = vmatprep.subr.bf16.mxu0 0
        %675 = vmatpush1.bf16.msra.mxu0 0
        %676 = vmatprep.subr.bf16.mxu0 0
        %677 = vmatpush1.bf16.msra.mxu0 0
        %678 = vmatprep.subr.bf16.mxu0 0
        %679 = vmatpush1.bf16.msra.mxu0 0
        %680 = vmatprep.subr.bf16.mxu0 0
        %681 = vmatpush1.bf16.msra.mxu0 0
        %682 = vmatprep.subr.bf16.mxu0 0
        %683 = vmatpush1.bf16.msra.mxu0 0
        %684 = vmatprep.subr.bf16.mxu0 0
        %685 = vmatpush1.bf16.msra.mxu0 0
        %686 = vmatprep.subr.bf16.mxu0 0
        %687 = vmatpush1.bf16.msra.mxu0 0
        %688 = vmatprep.subr.bf16.mxu0 0
        %689 = vmatpush1.bf16.msra.mxu0 0
        %690 = vmatprep.subr.bf16.mxu0 0
        %691 = vmatpush1.bf16.msra.mxu0 0
        %692 = vmatprep.subr.bf16.mxu0 0
        %693 = vmatpush1.bf16.msra.mxu0 0
        %694 = vmatprep.subr.bf16.mxu0 0
        %695 = vmatpush1.bf16.msra.mxu0 0
        %696 = vmatprep.subr.bf16.mxu0 0
        %697 = vmatpush1.bf16.msra.mxu0 0
        %698 = vmatprep.subr.bf16.mxu0 0
        %699 = vmatpush1.bf16.msra.mxu0 0
        %700 = vmatprep.subr.bf16.mxu0 0
        %701 = vmatpush1.bf16.msra.mxu0 0
        %702 = vmatprep.mubr.bf16.mxu0 0
        %703 = vmatmul.mubr.bf16.gmra.mrb[0].mxu0 %v307
        %v704 = vpop.f32.mrb[0].mxu0
        %v705 = vadd.f32 0.0, %v704
        %v706 = vpop.f32.mrb[0].mxu0
        %v707 = vpop.f32.mrb[0].mxu0
        %v708 = vpop.f32.mrb[0].mxu0
        %709 = vdwg.mxu0
        %s710 = scalar_lea.vmem %s3, 48
        %v711 = vld [vmem:[%s710] sm:$0xf]
        %v712 = vld [vmem:[%s710 + $0x4] sm:$0xf]
        %v713 = vld [vmem:[%s710 + $0x8] sm:$0xf]
        %v714 = vld [vmem:[%s710 + $0xc] sm:$0xf]
        %v719 = vunpack.c.l.b16 %v711
        %v720 = vunpack.c.l.b16 %v712
        %v721 = vunpack.c.l.b16 %v713
        %v722 = vunpack.c.l.b16 %v714
        %v723 = vpack.c.b16 %v720, %v719
        %v724 = vpack.c.b16 %v722, %v721
        %727 = vmatprep.subr.bf16.mxu0 0
        %728 = vmatpush1.bf16.msra.mxu0 %v723
        %729 = vmatprep.subr.bf16.mxu0 0
        %730 = vmatpush1.bf16.msra.mxu0 %v724
        %731 = vmatprep.subr.bf16.mxu0 0
        %732 = vmatpush1.bf16.msra.mxu0 0
        %733 = vmatprep.subr.bf16.mxu0 0
        %734 = vmatpush1.bf16.msra.mxu0 0
        %735 = vmatprep.subr.bf16.mxu0 0
        %736 = vmatpush1.bf16.msra.mxu0 0
        %737 = vmatprep.subr.bf16.mxu0 0
        %738 = vmatpush1.bf16.msra.mxu0 0
        %739 = vmatprep.subr.bf16.mxu0 0
        %740 = vmatpush1.bf16.msra.mxu0 0
        %741 = vmatprep.subr.bf16.mxu0 0
        %742 = vmatpush1.bf16.msra.mxu0 0
        %743 = vmatprep.subr.bf16.mxu0 0
        %744 = vmatpush1.bf16.msra.mxu0 0
        %745 = vmatprep.subr.bf16.mxu0 0
        %746 = vmatpush1.bf16.msra.mxu0 0
        %747 = vmatprep.subr.bf16.mxu0 0
        %748 = vmatpush1.bf16.msra.mxu0 0
        %749 = vmatprep.subr.bf16.mxu0 0
        %750 = vmatpush1.bf16.msra.mxu0 0
        %751 = vmatprep.subr.bf16.mxu0 0
        %752 = vmatpush1.bf16.msra.mxu0 0
        %753 = vmatprep.subr.bf16.mxu0 0
        %754 = vmatpush1.bf16.msra.mxu0 0
        %755 = vmatprep.subr.bf16.mxu0 0
        %756 = vmatpush1.bf16.msra.mxu0 0
        %757 = vmatprep.subr.bf16.mxu0 0
        %758 = vmatpush1.bf16.msra.mxu0 0
        %759 = vmatprep.mubr.bf16.mxu0 0
        %760 = vmatmul.mubr.bf16.gmra.mrb[0].mxu0 %v366
        %v761 = vpop.f32.mrb[0].mxu0
        %v762 = vadd.f32 0.0, %v761
        %v763 = vpop.f32.mrb[0].mxu0
        %v764 = vpop.f32.mrb[0].mxu0
        %v765 = vpop.f32.mrb[0].mxu0
        %766 = vdwg.mxu0
        %v767 = vpack.c.bf16 %v705, %v705
        %s768 = scalar_lea.vmem %s264, 12 [#allocation2]
        %769 = vst.msk [vmem:[%s768] sm:$0xf] %vm409, %v767
        %v770 = vpack.c.bf16 %v762, %v762
        %s771 = scalar_lea.vmem %s271, 12 [#allocation4]
        %772 = vst.msk [vmem:[%s771] sm:$0xf] %vm409, %v770
        %s773 = sand.u32 %s143, 1
        %s774 = scalar_lea.sflag [#allocation3], %s773
        %s775 = sand.u32 %s143, 1
        %s776 = smul.addr %s775, 16
        %s777 = scalar_lea.vmem [#allocation2], %s776
        %s778 = sand.u32 %s171, 1
        %s779 = scalar_lea.sflag [#allocation5], %s778
        %s780 = sand.u32 %s171, 1
        %s781 = smul.addr %s780, 16
        %s782 = scalar_lea.vmem [#allocation4], %s781
        // Predicated region
        $region37: #{tpu_custom_call.1} parent=35 // pred_check
          %p783 = pneg %p153
        $region38: #{tpu_custom_call.1} parent=35 // pred_check_branch
          %785 = sbr.rel (%p783) target = $region40
        $region39: #{tpu_custom_call.1} parent=35 // pred_region
          %s787 = ssub.s32 256, 256
          %788 = vsyncadd %s774, %s787
          %s789 = smul.addr %s27, 4
          %s790 = sadd.s32 %s28, %s789
          %s791 = smul.addr %s790, 64
          %s792 = scalar_lea.hbm %s4, %s791
          %s793 = sshll.u32 %s777, 4
          %s794 = int_to_ptr.vmem [resolvable:$true] %s793
          %799 = dma.vmem_to_hbm [thread:$0]  %s794, 256, %s792, %s774, 64, 64, 4
        $region40: #{tpu_custom_call.1} parent=35 // pred_fallthru
          _
        // Predicated region
        $region41: #{tpu_custom_call.1} parent=35 // pred_check
          %p800 = pneg %p181
        $region42: #{tpu_custom_call.1} parent=35 // pred_check_branch
          %802 = sbr.rel (%p800) target = $region44
        $region43: #{tpu_custom_call.1} parent=35 // pred_region
          %s804 = ssub.s32 256, 256
          %805 = vsyncadd %s779, %s804
          %s806 = smul.addr %s27, 4
          %s807 = sadd.s32 %s28, %s806
          %s808 = smul.addr %s807, 64
          %s809 = scalar_lea.hbm %s5, %s808
          %s810 = sshll.u32 %s782, 4
          %s811 = int_to_ptr.vmem [resolvable:$true] %s810
          %816 = dma.vmem_to_hbm [thread:$0]  %s811, 256, %s809, %s779, 64, 64, 4
        $region44: #{tpu_custom_call.1} parent=35 // pred_fallthru
          _
      $region36: #{tpu_custom_call.1} parent=5 // pred_fallthru
        _
      %p817 = scmp.le.s32.totalorder 2, %s18
      // Predicated region
      $region45: #{tpu_custom_call.1} parent=5 // pred_check
        %p818 = pneg %p817
      $region46: #{tpu_custom_call.1} parent=5 // pred_check_branch
        %820 = sbr.rel (%p818) target = $region48
      $region47: #{tpu_custom_call.1} parent=5 // pred_region
        %s821 = ssub.s32 %s18, 2
        // Predicated region
        $region49: #{tpu_custom_call.1} parent=47 // pred_check
          %p822 = pneg %p159
        $region50: #{tpu_custom_call.1} parent=47 // pred_check_branch
          %824 = sbr.rel (%p822) target = $region52
        $region51: #{tpu_custom_call.1} parent=47 // pred_region
          %s825 = sand.u32 %s144, 1
          %s826 = scalar_lea.sflag [#allocation3], %s825
          %s827 = sand.u32 %s144, 1
          %s828 = smul.addr %s827, 16
          %s829 = scalar_lea.vmem [#allocation2], %s828
          %830 = dma.done %s826, 256
        $region52: #{tpu_custom_call.1} parent=47 // pred_fallthru
          _
        // Predicated region
        $region53: #{tpu_custom_call.1} parent=47 // pred_check
          %p831 = pneg %p187
        $region54: #{tpu_custom_call.1} parent=47 // pred_check_branch
          %833 = sbr.rel (%p831) target = $region56
        $region55: #{tpu_custom_call.1} parent=47 // pred_region
          %s834 = sand.u32 %s172, 1
          %s835 = scalar_lea.sflag [#allocation5], %s834
          %s836 = sand.u32 %s172, 1
          %s837 = smul.addr %s836, 16
          %s838 = scalar_lea.vmem [#allocation4], %s837
          %839 = dma.done %s835, 256
        $region56: #{tpu_custom_call.1} parent=47 // pred_fallthru
          _
      $region48: #{tpu_custom_call.1} parent=5 // pred_fallthru
        _
    $region6: #{tpu_custom_call.1} parent=1 // loop_footer
      %s22 = sadd.s32 1, %s18
    $region7: #{tpu_custom_call.1} parent=1 // loop_footer_branch
      %17 = sbr.rel target = $region3
    $region8: #{tpu_custom_call.1} parent=1 // loop_exit
      _
    %840 = vsyncpa [#allocation3], 1
    %s841 = scalar_lea.sflag [#allocation3], 1
    %842 = vsyncpa %s841, 1
    %843 = vsyncpa [#allocation5], 1
    %s844 = scalar_lea.sflag [#allocation5], 1
    %845 = vsyncpa %s844, 1

</llo_original>
